<compile_context>
chip_gen: v5e
topology: v5e:2x2
jax: 0.10.0
libtpu: 0.0.40
codegen_flags: <defaults>
</compile_context>

<pallas_src>
import jax
import jax.numpy as jnp
from jax.experimental import pallas as pl
from jax.experimental.pallas import tpu as pltpu


def _ffn_kernel(x_ref, w1_ref, b1_ref, w2_ref, b2_ref, o_ref, acc_ref):
    # x_ref  : (tm, dmodel)  bf16
    # w1_ref : (dmodel, tk)  bf16     b1_ref : (1, tk)     f32
    # w2_ref : (tk, dmodel)  bf16     b2_ref : (1, dmodel) f32
    # o_ref  : (tm, dmodel)  out dtype
    # acc_ref: (tm, dmodel)  f32 scratch accumulator
    k = pl.program_id(1)

    # First matmul chunk + bias + ReLU, in f32 accumulate domain.
    h = jnp.dot(x_ref[...], w1_ref[...], preferred_element_type=jnp.float32)
    h = jnp.maximum(h + b1_ref[...], 0.0)

    # Second matmul: this hidden chunk's contribution to the output.
    prod = jnp.dot(h.astype(w2_ref.dtype), w2_ref[...],
                   preferred_element_type=jnp.float32)

    # No explicit zero-fill: first reduction step writes, later steps add.
    @pl.when(k == 0)
    def _init():
        acc_ref[...] = prod

    @pl.when(k > 0)
    def _accum():
        acc_ref[...] += prod

    @pl.when(k == pl.num_programs(1) - 1)
    def _finalize():
        o_ref[...] = (acc_ref[...] + b2_ref[...]).astype(o_ref.dtype)


def _round_up(a, b):
    return (a + b - 1) // b * b


def _vmem_bytes(tm, tk, dmodel, out_itemsize):
    """Rough VMEM footprint of one grid step with double-buffered blocks."""
    x_blk = tm * dmodel * 2 * 2                 # bf16, 2 buffers
    w1_blk = dmodel * tk * 2 * 2
    b1_blk = max(tk, 128) * 4 * 2
    w2_blk = tk * dmodel * 2 * 2
    b2_blk = max(dmodel, 128) * 4 * 2
    out_blk = tm * dmodel * out_itemsize * 2
    acc = tm * dmodel * 4                       # f32 scratch, single buffer
    return x_blk + w1_blk + b1_blk + w2_blk + b2_blk + out_blk + acc


def _vmem_budget():
    """Usable VMEM budget (bytes), leaving headroom below physical capacity."""
    try:
        phys = pltpu.get_tpu_info().vmem_capacity_bytes
    except Exception:
        phys = 64 << 20                         # conservative (v7x per-TC)
    return max(32 << 20, int(phys * 0.72))


def _select_tiles(M, dmodel, inner_dim, out_itemsize, budget):
    """Pick (tm, tk). Larger tm first (weight reuse / arithmetic intensity),
    then larger tk (fewer grid steps)."""
    m_cap = _round_up(M, 128)                   # >=128, multiple of 128
    for tm in (768, 512, 384, 256, 128):
        tm_eff = min(tm, m_cap)
        for tk in (1024, 512, 256):
            tk_eff = inner_dim if inner_dim <= tk else tk
            if _vmem_bytes(tm_eff, tk_eff, dmodel, out_itemsize) <= budget:
                return tm_eff, tk_eff
    return min(128, m_cap), (inner_dim if inner_dim <= 256 else 256)


def feed_forward(x, w1, b1, w2, b2, *, out_dtype=None):
    """x: (batch, seq, dmodel); W stored (in, out); returns (batch, seq, dmodel).

    Note: hidden activations are rounded to bf16 per tk-chunk before the
    second matmul (intentional MXU-operand choice; slightly lower precision
    than a pure-f32 PyTorch reference).
    """
    batch, seq, dmodel = x.shape
    inner_dim = w1.shape[1]
    M = batch * seq
    out_dtype = x.dtype if out_dtype is None else jnp.dtype(out_dtype)

    # bf16 MXU operands, f32 accumulation; biases stay f32.
    x2d = x.reshape(M, dmodel).astype(jnp.bfloat16)
    w1c = w1.astype(jnp.bfloat16)
    w2c = w2.astype(jnp.bfloat16)
    b1r = b1.reshape(1, inner_dim).astype(jnp.float32)
    b2r = b2.reshape(1, dmodel).astype(jnp.float32)

    budget = _vmem_budget()
    tm_eff, tk_eff = _select_tiles(M, dmodel, inner_dim, out_dtype.itemsize, budget)

    # Row tiling: pad M up to a tile multiple (multiple of 128, no asserts).
    m_pad = _round_up(M, tm_eff)
    if m_pad != M:
        x2d = jnp.pad(x2d, ((0, m_pad - M), (0, 0)))

    # Hidden-dim reduction tiling: zero pad (ReLU(0)=0, 0*W2=0 keeps the math
    # exact as long as padded b1 entries stay 0).
    if tk_eff == inner_dim:
        k_pad = inner_dim
    else:
        k_pad = _round_up(inner_dim, tk_eff)
        if k_pad != inner_dim:
            pad_k = k_pad - inner_dim
            w1c = jnp.pad(w1c, ((0, 0), (0, pad_k)))
            b1r = jnp.pad(b1r, ((0, 0), (0, pad_k)))
            w2c = jnp.pad(w2c, ((0, pad_k), (0, 0)))

    grid = (m_pad // tm_eff, k_pad // tk_eff)
    n_row_tiles = grid[0]

    # Weights are re-streamed from HBM once per row tile (index_map depends
    # only on k) -> account for that in the advisory cost estimate.
    cost = pl.CostEstimate(
        flops=4 * M * dmodel * inner_dim,
        transcendentals=0,
        bytes_accessed=int(
            x2d.size * 2
            + n_row_tiles * (w1c.size * 2 + w2c.size * 2 + b1r.size * 4 + b2r.size * 4)
            + m_pad * dmodel * out_dtype.itemsize),
    )

    out2d = pl.pallas_call(
        _ffn_kernel,
        out_shape=jax.ShapeDtypeStruct((m_pad, dmodel), out_dtype),
        grid_spec=pltpu.PrefetchScalarGridSpec(
            num_scalar_prefetch=0,
            grid=grid,
            in_specs=[
                pl.BlockSpec((tm_eff, dmodel), lambda i, k: (i, 0)),   # x rows
                pl.BlockSpec((dmodel, tk_eff), lambda i, k: (0, k)),   # W1 col tile
                pl.BlockSpec((1, tk_eff),      lambda i, k: (0, k)),   # b1 tile
                pl.BlockSpec((tk_eff, dmodel), lambda i, k: (k, 0)),   # W2 row tile
                pl.BlockSpec((1, dmodel),      lambda i, k: (0, 0)),   # b2
            ],
            out_specs=pl.BlockSpec((tm_eff, dmodel), lambda i, k: (i, 0)),
            scratch_shapes=[pltpu.VMEM((tm_eff, dmodel), jnp.float32)],
        ),
        compiler_params=pltpu.CompilerParams(
            dimension_semantics=("parallel", "arbitrary"),
            vmem_limit_bytes=budget),
        cost_estimate=cost,
    )(x2d, w1c, b1r, w2c, b2r)

    return out2d[:M].reshape(batch, seq, dmodel).astype(out_dtype)


def init_params(key, dmodel, inner_dim, dtype=jnp.float32):
    """Deterministic synthetic parameters (nn.Linear shapes, stored (in,out))."""
    k1, k2, k3, k4 = jax.random.split(key, 4)
    lim1 = 1.0 / jnp.sqrt(dmodel)
    lim2 = 1.0 / jnp.sqrt(inner_dim)
    w1 = jax.random.uniform(k1, (dmodel, inner_dim), dtype, -lim1, lim1)
    b1 = jax.random.uniform(k2, (inner_dim,), dtype, -lim1, lim1)
    w2 = jax.random.uniform(k3, (inner_dim, dmodel), dtype, -lim2, lim2)
    b2 = jax.random.uniform(k4, (dmodel,), dtype, -lim2, lim2)
    return w1, b1, w2, b2


if __name__ == "__main__":
    batch, seq, dmodel, inner_dim = 2, 8, 32, 64

    key = jax.random.PRNGKey(0)
    kx, kp = jax.random.split(key)
    x = jax.random.normal(kx, (batch, seq, dmodel), jnp.float32)
    w1, b1, w2, b2 = init_params(kp, dmodel, inner_dim)

    out = feed_forward(x, w1, b1, w2, b2)
    out = jax.block_until_ready(out)
    assert out.shape == (batch, seq, dmodel)
    assert out.dtype == x.dtype

    # Reference mirroring the kernel's bf16 operands / f32 accumulation.
    f32 = jnp.float32
    xb = x.astype(jnp.bfloat16).astype(f32)
    w1b = w1.astype(jnp.bfloat16).astype(f32)
    w2b = w2.astype(jnp.bfloat16).astype(f32)
    h = jnp.maximum(xb @ w1b + b1, 0.0)
    hb = h.astype(jnp.bfloat16).astype(f32)
    ref_bf16 = hb @ w2b + b2
    assert jnp.allclose(out, ref_bf16, atol=2e-3, rtol=2e-3), \
        float(jnp.max(jnp.abs(out - ref_bf16)))

    # Loose check against the pure-f32 PyTorch-equivalent math.
    ref_f32 = jnp.maximum(x @ w1 + b1, 0.0) @ w2 + b2
    assert jnp.allclose(out, ref_f32, atol=5e-2, rtol=5e-2)

    print("KERNEL_OK")
</pallas_src>

<mosaic_0001>
module attributes {stable_mosaic.version = 11 : i64} {
  func.func @_ffn_kernel(%arg0: i32, %arg1: i32, %arg2: memref<128x32xbf16, #tpu.memory_space<vmem>>, %arg3: memref<32x64xbf16, #tpu.memory_space<vmem>>, %arg4: memref<1x64xf32, #tpu.memory_space<vmem>>, %arg5: memref<64x32xbf16, #tpu.memory_space<vmem>>, %arg6: memref<1x32xf32, #tpu.memory_space<vmem>>, %arg7: memref<128x32xf32, #tpu.memory_space<vmem>>, %arg8: memref<128x32xf32, #tpu.memory_space<vmem>>) attributes {dimension_semantics = [#tpu.dimension_semantics<parallel>, #tpu.dimension_semantics<arbitrary>], iteration_bounds = array<i64: 1, 1>, scalar_prefetch = 0 : i64, scratch_operands = 1 : i64, tpu.core_type = #tpu.core_type<tc>, window_params = [{transform_indices = @transform_0, window_bounds = array<i64: 128, 32>}, {transform_indices = @transform_1, window_bounds = array<i64: 32, 64>}, {transform_indices = @transform_2, window_bounds = array<i64: 1, 64>}, {transform_indices = @transform_3, window_bounds = array<i64: 64, 32>}, {pipeline_mode = #tpu.pipeline_mode<synchronous>, transform_indices = @transform_4, window_bounds = array<i64: 1, 32>}, {transform_indices = @transform_5, window_bounds = array<i64: 128, 32>}]} {
    %c0 = arith.constant 0 : index
    %c0_0 = arith.constant 0 : index
    %0 = vector.load %arg2[%c0, %c0_0] : memref<128x32xbf16, #tpu.memory_space<vmem>>, vector<128x32xbf16>
    %c0_1 = arith.constant 0 : index
    %c0_2 = arith.constant 0 : index
    %1 = vector.load %arg3[%c0_1, %c0_2] : memref<32x64xbf16, #tpu.memory_space<vmem>>, vector<32x64xbf16>
    %cst = arith.constant dense<0.000000e+00> : vector<128x64xf32>
    %2 = tpu.matmul %0, %1, %cst {dimension_numbers = #tpu.dot_dimension_numbers<[1], [0], [0], [1], [0, 0, 1, 1], [], []>} : vector<128x32xbf16>, vector<32x64xbf16>, vector<128x64xf32> -> vector<128x64xf32>
    %c0_3 = arith.constant 0 : index
    %c0_4 = arith.constant 0 : index
    %3 = vector.load %arg4[%c0_3, %c0_4] : memref<1x64xf32, #tpu.memory_space<vmem>>, vector<1x64xf32>
    %4 = vector.broadcast %3 : vector<1x64xf32> to vector<128x64xf32>
    %5 = arith.addf %2, %4 : vector<128x64xf32>
    %cst_5 = arith.constant 0.000000e+00 : f32
    %6 = vector.broadcast %cst_5 : f32 to vector<128x64xf32>
    %7 = arith.maximumf %5, %6 : vector<128x64xf32>
    %8 = arith.truncf %7 : vector<128x64xf32> to vector<128x64xbf16>
    %c0_6 = arith.constant 0 : index
    %c0_7 = arith.constant 0 : index
    %9 = vector.load %arg5[%c0_6, %c0_7] : memref<64x32xbf16, #tpu.memory_space<vmem>>, vector<64x32xbf16>
    %cst_8 = arith.constant dense<0.000000e+00> : vector<128x32xf32>
    %10 = tpu.matmul %8, %9, %cst_8 {dimension_numbers = #tpu.dot_dimension_numbers<[1], [0], [0], [1], [0, 0, 1, 1], [], []>} : vector<128x64xbf16>, vector<64x32xbf16>, vector<128x32xf32> -> vector<128x32xf32>
    %c0_i32 = arith.constant 0 : i32
    %11 = arith.cmpi eq, %arg1, %c0_i32 : i32
    %12 = arith.extui %11 : i1 to i32
    %c0_i32_9 = arith.constant 0 : i32
    %13 = arith.cmpi ne, %12, %c0_i32_9 : i32
    scf.if %13 {
      %c0_14 = arith.constant 0 : index
      %c0_15 = arith.constant 0 : index
      %20 = vector.load %arg8[%c0_14, %c0_15] : memref<128x32xf32, #tpu.memory_space<vmem>>, vector<128x32xf32>
      tpu.vector_store %arg8[%c0_14, %c0_15], %10 {strides = array<i32>} : memref<128x32xf32, #tpu.memory_space<vmem>>, vector<128x32xf32>,
    } else {
    }
    %c0_i32_10 = arith.constant 0 : i32
    %14 = arith.cmpi sgt, %arg1, %c0_i32_10 : i32
    %15 = arith.extui %14 : i1 to i32
    %c0_i32_11 = arith.constant 0 : i32
    %16 = arith.cmpi ne, %15, %c0_i32_11 : i32
    scf.if %16 {
      %c0_14 = arith.constant 0 : index
      %c0_15 = arith.constant 0 : index
      %20 = vector.load %arg8[%c0_14, %c0_15] : memref<128x32xf32, #tpu.memory_space<vmem>>, vector<128x32xf32>
      %21 = arith.addf %20, %10 : vector<128x32xf32>
      %c0_16 = arith.constant 0 : index
      %c0_17 = arith.constant 0 : index
      %22 = vector.load %arg8[%c0_16, %c0_17] : memref<128x32xf32, #tpu.memory_space<vmem>>, vector<128x32xf32>
      tpu.vector_store %arg8[%c0_16, %c0_17], %21 {strides = array<i32>} : memref<128x32xf32, #tpu.memory_space<vmem>>, vector<128x32xf32>,
    } else {
    }
    %c0_i32_12 = arith.constant 0 : i32
    %17 = arith.cmpi eq, %arg1, %c0_i32_12 : i32
    %18 = arith.extui %17 : i1 to i32
    %c0_i32_13 = arith.constant 0 : i32
    %19 = arith.cmpi ne, %18, %c0_i32_13 : i32
    scf.if %19 {
      %c0_14 = arith.constant 0 : index
      %c0_15 = arith.constant 0 : index
      %20 = vector.load %arg8[%c0_14, %c0_15] : memref<128x32xf32, #tpu.memory_space<vmem>>, vector<128x32xf32>
      %c0_16 = arith.constant 0 : index
      %c0_17 = arith.constant 0 : index
      %21 = vector.load %arg6[%c0_16, %c0_17] : memref<1x32xf32, #tpu.memory_space<vmem>>, vector<1x32xf32>
      %22 = vector.broadcast %21 : vector<1x32xf32> to vector<128x32xf32>
      %23 = arith.addf %20, %22 : vector<128x32xf32>
      %c0_18 = arith.constant 0 : index
      %c0_19 = arith.constant 0 : index
      %24 = vector.load %arg7[%c0_18, %c0_19] : memref<128x32xf32, #tpu.memory_space<vmem>>, vector<128x32xf32>
      tpu.vector_store %arg7[%c0_18, %c0_19], %23 {strides = array<i32>} : memref<128x32xf32, #tpu.memory_space<vmem>>, vector<128x32xf32>,
    } else {
    }
    return
  }
  func.func @transform_0(%arg0: i32, %arg1: i32) -> (i32, i32) {
    %c0_i32 = arith.constant 0 : i32
    %c0_i32_0 = arith.constant 0 : i32
    return %arg0, %c0_i32 : i32, i32
  }
  func.func @transform_1(%arg0: i32, %arg1: i32) -> (i32, i32) {
    %c0_i32 = arith.constant 0 : i32
    %c0_i32_0 = arith.constant 0 : i32
    return %c0_i32, %arg1 : i32, i32
  }
  func.func @transform_2(%arg0: i32, %arg1: i32) -> (i32, i32) {
    %c0_i32 = arith.constant 0 : i32
    %c0_i32_0 = arith.constant 0 : i32
    return %c0_i32, %arg1 : i32, i32
  }
  func.func @transform_3(%arg0: i32, %arg1: i32) -> (i32, i32) {
    %c0_i32 = arith.constant 0 : i32
    %c0_i32_0 = arith.constant 0 : i32
    return %arg1, %c0_i32 : i32, i32
  }
  func.func @transform_4(%arg0: i32, %arg1: i32) -> (i32, i32) {
    %c0_i32 = arith.constant 0 : i32
    %c0_i32_0 = arith.constant 0 : i32
    %c0_i32_1 = arith.constant 0 : i32
    return %c0_i32, %c0_i32_0 : i32, i32
  }
  func.func @transform_5(%arg0: i32, %arg1: i32) -> (i32, i32) {
    %c0_i32 = arith.constant 0 : i32
    %c0_i32_0 = arith.constant 0 : i32
    return %arg0, %c0_i32 : i32, i32
  }
}

</mosaic_0001>

<llo_original>
// kernel: tpu_custom_call.1
$region0: #{tpu_custom_call.1}
  #allocation0 [shape = 'u32[]', space=smem, size = 0x4, offset = 0x4, fixed_abs, tag = 'smem constant byte address 0x4 - core index']
  #allocation1 [shape = 'u32[72,128]{1,0:T(1,128)}', space=vmem, size = 0x9000, scoped, tag = 'internal scratch']
  #allocation2 [shape = 'f32[128,32]{1,0:T(8,128)}', space=vmem, size = 0x10000, scoped, tag = 'scratch operand']
  %s0 = inlined_call_operand.vmem [shape: bf16[128,32], index: 0, kind: input, shape index: {}]
  %s1 = inlined_call_operand.vmem [shape: bf16[32,64], index: 1, kind: input, shape index: {}]
  %s2 = inlined_call_operand.vmem [shape: f32[1,64], index: 2, kind: input, shape index: {}]
  %s3 = inlined_call_operand.vmem [shape: bf16[64,32], index: 3, kind: input, shape index: {}]
  %s4 = inlined_call_operand.vmem [shape: f32[1,32], index: 4, kind: input, shape index: {}]
  %s5 = inlined_call_operand.vmem [shape: f32[128,32], index: 5, kind: output, shape index: {}]
  %s6 = sld [smem:[#allocation0]]
  $region42: #{tpu_custom_call.1} parent=0
    _
  %s8 = ssub.s32 1, %s6
  %s9 = scalar_select 0, %s8, %s6
  // Predicated region
  $region2: #{tpu_custom_call.1} parent=0 // pred_check
    _
  $region3: #{tpu_custom_call.1} parent=0 // pred_check_branch
    %11 = sbr.rel (0) target = $region5
  $region4: #{tpu_custom_call.1} parent=0 // pred_region
    _
  $region5: #{tpu_custom_call.1} parent=0 // pred_fallthru
    _
  // Predicated region
  $region6: #{tpu_custom_call.1} parent=0 // pred_check
    _
  $region7: #{tpu_custom_call.1} parent=0 // pred_check_branch
    %13 = sbr.rel (0) target = $region9
  $region8: #{tpu_custom_call.1} parent=0 // pred_region
    _
  $region9: #{tpu_custom_call.1} parent=0 // pred_fallthru
    _
  // Predicated region
  $region10: #{tpu_custom_call.1} parent=0 // pred_check
    _
  $region11: #{tpu_custom_call.1} parent=0 // pred_check_branch
    %15 = sbr.rel (0) target = $region13
  $region12: #{tpu_custom_call.1} parent=0 // pred_region
    _
  $region13: #{tpu_custom_call.1} parent=0 // pred_fallthru
    _
  // Predicated region
  $region14: #{tpu_custom_call.1} parent=0 // pred_check
    _
  $region15: #{tpu_custom_call.1} parent=0 // pred_check_branch
    %17 = sbr.rel (0) target = $region17
  $region16: #{tpu_custom_call.1} parent=0 // pred_region
    _
  $region17: #{tpu_custom_call.1} parent=0 // pred_fallthru
    _
  // Predicated region
  $region18: #{tpu_custom_call.1} parent=0 // pred_check
    _
  $region19: #{tpu_custom_call.1} parent=0 // pred_check_branch
    %19 = sbr.rel (0) target = $region21
  $region20: #{tpu_custom_call.1} parent=0 // pred_region
    _
  $region21: #{tpu_custom_call.1} parent=0 // pred_fallthru
    _
  %v21 = vld [vmem:[%s0] sm:$0xf]
  %v22 = vld [vmem:[%s0 + $0x4] sm:$0xf]
  %v23 = vld [vmem:[%s0 + $0x8] sm:$0xf]
  %v24 = vld [vmem:[%s0 + $0xc] sm:$0xf]
  %v25 = vld [vmem:[%s0 + $0x10] sm:$0xf]
  %v26 = vld [vmem:[%s0 + $0x14] sm:$0xf]
  %v27 = vld [vmem:[%s0 + $0x18] sm:$0xf]
  %v28 = vld [vmem:[%s0 + $0x1c] sm:$0xf]
  %v29 = vld [vmem:[%s0 + $0x20] sm:$0xf]
  %v30 = vld [vmem:[%s0 + $0x24] sm:$0xf]
  %v31 = vld [vmem:[%s0 + $0x28] sm:$0xf]
  %v32 = vld [vmem:[%s0 + $0x2c] sm:$0xf]
  %v33 = vld [vmem:[%s0 + $0x30] sm:$0xf]
  %v34 = vld [vmem:[%s0 + $0x34] sm:$0xf]
  %v35 = vld [vmem:[%s0 + $0x38] sm:$0xf]
  %v36 = vld [vmem:[%s0 + $0x3c] sm:$0xf]
  %v37 = vld [vmem:[%s1] sm:$0xf]
  %v38 = vld [vmem:[%s1 + $0x4] sm:$0xf]
  %v39 = vld [vmem:[%s1 + $0x8] sm:$0xf]
  %v40 = vld [vmem:[%s1 + $0xc] sm:$0xf]
  %v41 = vld [vmem:[%s2] sm:$0x1]
  %v43 = vperm.slane %v41, 0
  %v61 = vunpack.c.l.b16 %v21
  %v62 = vunpack.c.l.b16 %v22
  %v63 = vunpack.c.l.b16 %v23
  %v64 = vunpack.c.l.b16 %v24
  %v65 = vunpack.c.l.b16 %v25
  %v66 = vunpack.c.l.b16 %v26
  %v67 = vunpack.c.l.b16 %v27
  %v68 = vunpack.c.l.b16 %v28
  %v69 = vunpack.c.l.b16 %v29
  %v70 = vunpack.c.l.b16 %v30
  %v71 = vunpack.c.l.b16 %v31
  %v72 = vunpack.c.l.b16 %v32
  %v73 = vunpack.c.l.b16 %v33
  %v74 = vunpack.c.l.b16 %v34
  %v75 = vunpack.c.l.b16 %v35
  %v76 = vunpack.c.l.b16 %v36
  %v77 = vpack.c.b16 %v62, %v61
  %v78 = vpack.c.b16 %v64, %v63
  %v79 = vpack.c.b16 %v66, %v65
  %v80 = vpack.c.b16 %v68, %v67
  %v81 = vpack.c.b16 %v70, %v69
  %v82 = vpack.c.b16 %v72, %v71
  %v83 = vpack.c.b16 %v74, %v73
  %v84 = vpack.c.b16 %v76, %v75
  %v89 = vunpack.c.l.b16 %v37
  %v90 = vunpack.c.l.b16 %v38
  %v91 = vunpack.c.l.b16 %v39
  %v92 = vunpack.c.l.b16 %v40
  %v93 = vpack.c.b16 %v90, %v89
  %v94 = vpack.c.b16 %v92, %v91
  %vm97 = vcmask 261120
  %v99 = vsel %vm97, %v77, 0
  %v102 = vsel %vm97, %v78, 0
  %v105 = vsel %vm97, %v79, 0
  %v108 = vsel %vm97, %v80, 0
  %v111 = vsel %vm97, %v81, 0
  %v114 = vsel %vm97, %v82, 0
  %v117 = vsel %vm97, %v83, 0
  %v120 = vsel %vm97, %v84, 0
  %122 = vmatpush.bf16.msra.mxu0 0
  %123 = vmatpush.bf16.msra.mxu0 0
  %124 = vmatpush.bf16.msra.mxu0 0
  %125 = vmatpush.bf16.msra.mxu0 0
  %126 = vmatpush.bf16.msra.mxu0 0
  %127 = vmatpush.bf16.msra.mxu0 0
  %128 = vmatpush.bf16.msra.mxu0 %v94
  %129 = vmatpush.bf16.msra.mxu0 %v93
  %130 = vmatmul.bf16.gmra.mxu0 %v99
  %v131 = vpop.f32.mrf.mxu0
  %v132 = vadd.f32 %v43, %v131
  %v133 = vpop.f32.mrf.mxu0
  %v134 = vadd.f32 %v43, %v133
  %135 = vmatmul.bf16.gmra.mxu0 %v102
  %v136 = vpop.f32.mrf.mxu0
  %v137 = vadd.f32 %v43, %v136
  %v138 = vpop.f32.mrf.mxu0
  %v139 = vadd.f32 %v43, %v138
  %140 = vmatmul.bf16.gmra.mxu0 %v105
  %v141 = vpop.f32.mrf.mxu0
  %v142 = vadd.f32 %v43, %v141
  %v143 = vpop.f32.mrf.mxu0
  %v144 = vadd.f32 %v43, %v143
  %145 = vmatmul.bf16.gmra.mxu0 %v108
  %v146 = vpop.f32.mrf.mxu0
  %v147 = vadd.f32 %v43, %v146
  %v148 = vpop.f32.mrf.mxu0
  %v149 = vadd.f32 %v43, %v148
  %150 = vmatmul.bf16.gmra.mxu0 %v111
  %v151 = vpop.f32.mrf.mxu0
  %v152 = vadd.f32 %v43, %v151
  %v153 = vpop.f32.mrf.mxu0
  %v154 = vadd.f32 %v43, %v153
  %155 = vmatmul.bf16.gmra.mxu0 %v114
  %v156 = vpop.f32.mrf.mxu0
  %v157 = vadd.f32 %v43, %v156
  %v158 = vpop.f32.mrf.mxu0
  %v159 = vadd.f32 %v43, %v158
  %160 = vmatmul.bf16.gmra.mxu0 %v117
  %v161 = vpop.f32.mrf.mxu0
  %v162 = vadd.f32 %v43, %v161
  %v163 = vpop.f32.mrf.mxu0
  %v164 = vadd.f32 %v43, %v163
  %165 = vmatmul.bf16.gmra.mxu0 %v120
  %v166 = vpop.f32.mrf.mxu0
  %v167 = vadd.f32 %v43, %v166
  %v168 = vpop.f32.mrf.mxu0
  %v169 = vadd.f32 %v43, %v168
  %170 = vdwg.mxu0
  %v171 = vmax.f32 %v132, 0.0
  %v172 = vmax.f32 %v134, 0.0
  %v173 = vmax.f32 %v137, 0.0
  %v174 = vmax.f32 %v139, 0.0
  %v175 = vmax.f32 %v142, 0.0
  %v176 = vmax.f32 %v144, 0.0
  %v177 = vmax.f32 %v147, 0.0
  %v178 = vmax.f32 %v149, 0.0
  %v179 = vmax.f32 %v152, 0.0
  %v180 = vmax.f32 %v154, 0.0
  %v181 = vmax.f32 %v157, 0.0
  %v182 = vmax.f32 %v159, 0.0
  %v183 = vmax.f32 %v162, 0.0
  %v184 = vmax.f32 %v164, 0.0
  %v185 = vmax.f32 %v167, 0.0
  %v186 = vmax.f32 %v169, 0.0
  %v187 = vpack.c.bf16 %v172, %v171
  %v188 = vpack.c.bf16 %v174, %v173
  %v189 = vpack.c.bf16 %v176, %v175
  %v190 = vpack.c.bf16 %v178, %v177
  %v191 = vpack.c.bf16 %v180, %v179
  %v192 = vpack.c.bf16 %v182, %v181
  %v193 = vpack.c.bf16 %v184, %v183
  %v194 = vpack.c.bf16 %v186, %v185
  %v195 = vld [vmem:[%s3] sm:$0xf]
  %v196 = vld [vmem:[%s3 + $0x4] sm:$0xf]
  %v197 = vld [vmem:[%s3 + $0x8] sm:$0xf]
  %v198 = vld [vmem:[%s3 + $0xc] sm:$0xf]
  %v199 = vld [vmem:[%s3 + $0x10] sm:$0xf]
  %v200 = vld [vmem:[%s3 + $0x14] sm:$0xf]
  %v201 = vld [vmem:[%s3 + $0x18] sm:$0xf]
  %v202 = vld [vmem:[%s3 + $0x1c] sm:$0xf]
  %v211 = vunpack.c.l.b16 %v195
  %v212 = vunpack.c.l.b16 %v196
  %v213 = vunpack.c.l.b16 %v197
  %v214 = vunpack.c.l.b16 %v198
  %v215 = vunpack.c.l.b16 %v199
  %v216 = vunpack.c.l.b16 %v200
  %v217 = vunpack.c.l.b16 %v201
  %v218 = vunpack.c.l.b16 %v202
  %v219 = vpack.c.b16 %v212, %v211
  %v220 = vpack.c.b16 %v214, %v213
  %v221 = vpack.c.b16 %v216, %v215
  %v222 = vpack.c.b16 %v218, %v217
  %vm227 = vcmask 523264
  %v229 = vsel %vm227, %v187, 0
  %v232 = vsel %vm227, %v188, 0
  %v235 = vsel %vm227, %v189, 0
  %v238 = vsel %vm227, %v190, 0
  %v241 = vsel %vm227, %v191, 0
  %v244 = vsel %vm227, %v192, 0
  %v247 = vsel %vm227, %v193, 0
  %v250 = vsel %vm227, %v194, 0
  %252 = vmatpush.bf16.msra.mxu0 0
  %253 = vmatpush.bf16.msra.mxu0 0
  %254 = vmatpush.bf16.msra.mxu0 0
  %255 = vmatpush.bf16.msra.mxu0 0
  %256 = vmatpush.bf16.msra.mxu0 %v222
  %257 = vmatpush.bf16.msra.mxu0 %v221
  %258 = vmatpush.bf16.msra.mxu0 %v220
  %259 = vmatpush.bf16.msra.mxu0 %v219
  %260 = vmatmul.bf16.gmra.mxu0 %v229
  %v261 = vpop.f32.mrf.mxu0
  %v262 = vadd.f32 0.0, %v261
  %v263 = vpop.f32.mrf.mxu0
  %v264 = vadd.f32 0.0, %v263
  %265 = vmatmul.bf16.gmra.mxu0 %v232
  %v266 = vpop.f32.mrf.mxu0
  %v267 = vadd.f32 0.0, %v266
  %v268 = vpop.f32.mrf.mxu0
  %v269 = vadd.f32 0.0, %v268
  %270 = vmatmul.bf16.gmra.mxu0 %v235
  %v271 = vpop.f32.mrf.mxu0
  %v272 = vadd.f32 0.0, %v271
  %v273 = vpop.f32.mrf.mxu0
  %v274 = vadd.f32 0.0, %v273
  %275 = vmatmul.bf16.gmra.mxu0 %v238
  %v276 = vpop.f32.mrf.mxu0
  %v277 = vadd.f32 0.0, %v276
  %v278 = vpop.f32.mrf.mxu0
  %v279 = vadd.f32 0.0, %v278
  %280 = vmatmul.bf16.gmra.mxu0 %v241
  %v281 = vpop.f32.mrf.mxu0
  %v282 = vadd.f32 0.0, %v281
  %v283 = vpop.f32.mrf.mxu0
  %v284 = vadd.f32 0.0, %v283
  %285 = vmatmul.bf16.gmra.mxu0 %v244
  %v286 = vpop.f32.mrf.mxu0
  %v287 = vadd.f32 0.0, %v286
  %v288 = vpop.f32.mrf.mxu0
  %v289 = vadd.f32 0.0, %v288
  %290 = vmatmul.bf16.gmra.mxu0 %v247
  %v291 = vpop.f32.mrf.mxu0
  %v292 = vadd.f32 0.0, %v291
  %v293 = vpop.f32.mrf.mxu0
  %v294 = vadd.f32 0.0, %v293
  %295 = vmatmul.bf16.gmra.mxu0 %v250
  %v296 = vpop.f32.mrf.mxu0
  %v297 = vadd.f32 0.0, %v296
  %v298 = vpop.f32.mrf.mxu0
  %v299 = vadd.f32 0.0, %v298
  %300 = vdwg.mxu0
  %p301 = scmp.eq.s32.totalorder 0, 0
  // Predicated region
  $region22: #{tpu_custom_call.1} parent=0 // pred_check
    %p302 = pneg %p301
  $region23: #{tpu_custom_call.1} parent=0 // pred_check_branch
    %304 = sbr.rel (%p302) target = $region25
  $region24: #{tpu_custom_call.1} parent=0 // pred_region
    %305 = vst.msk [vmem:[#allocation2] sm:$0xff] %vm97, %v262
    %306 = vst.msk [vmem:[#allocation2 + $0x8] sm:$0xff] %vm97, %v264
    %307 = vst.msk [vmem:[#allocation2 + $0x10] sm:$0xff] %vm97, %v267
    %308 = vst.msk [vmem:[#allocation2 + $0x18] sm:$0xff] %vm97, %v269
    %309 = vst.msk [vmem:[#allocation2 + $0x20] sm:$0xff] %vm97, %v272
    %310 = vst.msk [vmem:[#allocation2 + $0x28] sm:$0xff] %vm97, %v274
    %311 = vst.msk [vmem:[#allocation2 + $0x30] sm:$0xff] %vm97, %v277
    %312 = vst.msk [vmem:[#allocation2 + $0x38] sm:$0xff] %vm97, %v279
    %313 = vst.msk [vmem:[#allocation2 + $0x40] sm:$0xff] %vm97, %v282
    %314 = vst.msk [vmem:[#allocation2 + $0x48] sm:$0xff] %vm97, %v284
    %315 = vst.msk [vmem:[#allocation2 + $0x50] sm:$0xff] %vm97, %v287
    %316 = vst.msk [vmem:[#allocation2 + $0x58] sm:$0xff] %vm97, %v289
    %317 = vst.msk [vmem:[#allocation2 + $0x60] sm:$0xff] %vm97, %v292
    %318 = vst.msk [vmem:[#allocation2 + $0x68] sm:$0xff] %vm97, %v294
    %319 = vst.msk [vmem:[#allocation2 + $0x70] sm:$0xff] %vm97, %v297
    %320 = vst.msk [vmem:[#allocation2 + $0x78] sm:$0xff] %vm97, %v299
  $region25: #{tpu_custom_call.1} parent=0 // pred_fallthru
    _
  %p321 = scmp.gt.s32.totalorder 0, 0
  // Predicated region
  $region26: #{tpu_custom_call.1} parent=0 // pred_check
    %p322 = pneg %p321
  $region27: #{tpu_custom_call.1} parent=0 // pred_check_branch
    %324 = sbr.rel (%p322) target = $region29
  $region28: #{tpu_custom_call.1} parent=0 // pred_region
    %v325 = vld [vmem:[#allocation2] sm:$0xff]
    %v326 = vld [vmem:[#allocation2 + $0x8] sm:$0xff]
    %v327 = vld [vmem:[#allocation2 + $0x10] sm:$0xff]
    %v328 = vld [vmem:[#allocation2 + $0x18] sm:$0xff]
    %v329 = vld [vmem:[#allocation2 + $0x20] sm:$0xff]
    %v330 = vld [vmem:[#allocation2 + $0x28] sm:$0xff]
    %v331 = vld [vmem:[#allocation2 + $0x30] sm:$0xff]
    %v332 = vld [vmem:[#allocation2 + $0x38] sm:$0xff]
    %v333 = vld [vmem:[#allocation2 + $0x40] sm:$0xff]
    %v334 = vld [vmem:[#allocation2 + $0x48] sm:$0xff]
    %v335 = vld [vmem:[#allocation2 + $0x50] sm:$0xff]
    %v336 = vld [vmem:[#allocation2 + $0x58] sm:$0xff]
    %v337 = vld [vmem:[#allocation2 + $0x60] sm:$0xff]
    %v338 = vld [vmem:[#allocation2 + $0x68] sm:$0xff]
    %v339 = vld [vmem:[#allocation2 + $0x70] sm:$0xff]
    %v340 = vld [vmem:[#allocation2 + $0x78] sm:$0xff]
    %v341 = vadd.f32 %v325, %v262
    %v342 = vadd.f32 %v326, %v264
    %v343 = vadd.f32 %v327, %v267
    %v344 = vadd.f32 %v328, %v269
    %v345 = vadd.f32 %v329, %v272
    %v346 = vadd.f32 %v330, %v274
    %v347 = vadd.f32 %v331, %v277
    %v348 = vadd.f32 %v332, %v279
    %v349 = vadd.f32 %v333, %v282
    %v350 = vadd.f32 %v334, %v284
    %v351 = vadd.f32 %v335, %v287
    %v352 = vadd.f32 %v336, %v289
    %v353 = vadd.f32 %v337, %v292
    %v354 = vadd.f32 %v338, %v294
    %v355 = vadd.f32 %v339, %v297
    %v356 = vadd.f32 %v340, %v299
    %357 = vst.msk [vmem:[#allocation2] sm:$0xff] %vm97, %v341
    %358 = vst.msk [vmem:[#allocation2 + $0x8] sm:$0xff] %vm97, %v342
    %359 = vst.msk [vmem:[#allocation2 + $0x10] sm:$0xff] %vm97, %v343
    %360 = vst.msk [vmem:[#allocation2 + $0x18] sm:$0xff] %vm97, %v344
    %361 = vst.msk [vmem:[#allocation2 + $0x20] sm:$0xff] %vm97, %v345
    %362 = vst.msk [vmem:[#allocation2 + $0x28] sm:$0xff] %vm97, %v346
    %363 = vst.msk [vmem:[#allocation2 + $0x30] sm:$0xff] %vm97, %v347
    %364 = vst.msk [vmem:[#allocation2 + $0x38] sm:$0xff] %vm97, %v348
    %365 = vst.msk [vmem:[#allocation2 + $0x40] sm:$0xff] %vm97, %v349
    %366 = vst.msk [vmem:[#allocation2 + $0x48] sm:$0xff] %vm97, %v350
    %367 = vst.msk [vmem:[#allocation2 + $0x50] sm:$0xff] %vm97, %v351
    %368 = vst.msk [vmem:[#allocation2 + $0x58] sm:$0xff] %vm97, %v352
    %369 = vst.msk [vmem:[#allocation2 + $0x60] sm:$0xff] %vm97, %v353
    %370 = vst.msk [vmem:[#allocation2 + $0x68] sm:$0xff] %vm97, %v354
    %371 = vst.msk [vmem:[#allocation2 + $0x70] sm:$0xff] %vm97, %v355
    %372 = vst.msk [vmem:[#allocation2 + $0x78] sm:$0xff] %vm97, %v356
  $region29: #{tpu_custom_call.1} parent=0 // pred_fallthru
    _
  // Predicated region
  $region30: #{tpu_custom_call.1} parent=0 // pred_check
    %p373 = pneg %p301
  $region31: #{tpu_custom_call.1} parent=0 // pred_check_branch
    %375 = sbr.rel (%p373) target = $region33
  $region32: #{tpu_custom_call.1} parent=0 // pred_region
    %v376 = vld [vmem:[#allocation2] sm:$0xff]
    %v377 = vld [vmem:[#allocation2 + $0x8] sm:$0xff]
    %v378 = vld [vmem:[#allocation2 + $0x10] sm:$0xff]
    %v379 = vld [vmem:[#allocation2 + $0x18] sm:$0xff]
    %v380 = vld [vmem:[#allocation2 + $0x20] sm:$0xff]
    %v381 = vld [vmem:[#allocation2 + $0x28] sm:$0xff]
    %v382 = vld [vmem:[#allocation2 + $0x30] sm:$0xff]
    %v383 = vld [vmem:[#allocation2 + $0x38] sm:$0xff]
    %v384 = vld [vmem:[#allocation2 + $0x40] sm:$0xff]
    %v385 = vld [vmem:[#allocation2 + $0x48] sm:$0xff]
    %v386 = vld [vmem:[#allocation2 + $0x50] sm:$0xff]
    %v387 = vld [vmem:[#allocation2 + $0x58] sm:$0xff]
    %v388 = vld [vmem:[#allocation2 + $0x60] sm:$0xff]
    %v389 = vld [vmem:[#allocation2 + $0x68] sm:$0xff]
    %v390 = vld [vmem:[#allocation2 + $0x70] sm:$0xff]
    %v391 = vld [vmem:[#allocation2 + $0x78] sm:$0xff]
    %v392 = vld [vmem:[%s4] sm:$0x1]
    %v394 = vperm.slane %v392, 0
    %v396 = vadd.f32 %v376, %v394
    %v397 = vadd.f32 %v377, %v394
    %v398 = vadd.f32 %v378, %v394
    %v399 = vadd.f32 %v379, %v394
    %v400 = vadd.f32 %v380, %v394
    %v401 = vadd.f32 %v381, %v394
    %v402 = vadd.f32 %v382, %v394
    %v403 = vadd.f32 %v383, %v394
    %v404 = vadd.f32 %v384, %v394
    %v405 = vadd.f32 %v385, %v394
    %v406 = vadd.f32 %v386, %v394
    %v407 = vadd.f32 %v387, %v394
    %v408 = vadd.f32 %v388, %v394
    %v409 = vadd.f32 %v389, %v394
    %v410 = vadd.f32 %v390, %v394
    %v411 = vadd.f32 %v391, %v394
    %412 = vst.msk [vmem:[%s5] sm:$0xff] %vm97, %v396
    %413 = vst.msk [vmem:[%s5 + $0x8] sm:$0xff] %vm97, %v397
    %414 = vst.msk [vmem:[%s5 + $0x10] sm:$0xff] %vm97, %v398
    %415 = vst.msk [vmem:[%s5 + $0x18] sm:$0xff] %vm97, %v399
    %416 = vst.msk [vmem:[%s5 + $0x20] sm:$0xff] %vm97, %v400
    %417 = vst.msk [vmem:[%s5 + $0x28] sm:$0xff] %vm97, %v401
    %418 = vst.msk [vmem:[%s5 + $0x30] sm:$0xff] %vm97, %v402
    %419 = vst.msk [vmem:[%s5 + $0x38] sm:$0xff] %vm97, %v403
    %420 = vst.msk [vmem:[%s5 + $0x40] sm:$0xff] %vm97, %v404
    %421 = vst.msk [vmem:[%s5 + $0x48] sm:$0xff] %vm97, %v405
    %422 = vst.msk [vmem:[%s5 + $0x50] sm:$0xff] %vm97, %v406
    %423 = vst.msk [vmem:[%s5 + $0x58] sm:$0xff] %vm97, %v407
    %424 = vst.msk [vmem:[%s5 + $0x60] sm:$0xff] %vm97, %v408
    %425 = vst.msk [vmem:[%s5 + $0x68] sm:$0xff] %vm97, %v409
    %426 = vst.msk [vmem:[%s5 + $0x70] sm:$0xff] %vm97, %v410
    %427 = vst.msk [vmem:[%s5 + $0x78] sm:$0xff] %vm97, %v411
  $region33: #{tpu_custom_call.1} parent=0 // pred_fallthru
    _
  // Predicated region
  $region34: #{tpu_custom_call.1} parent=0 // pred_check
    _
  $region35: #{tpu_custom_call.1} parent=0 // pred_check_branch
    %429 = sbr.rel (0) target = $region37
  $region36: #{tpu_custom_call.1} parent=0 // pred_region
    _
  $region37: #{tpu_custom_call.1} parent=0 // pred_fallthru
    _
  // Predicated region
  $region38: #{tpu_custom_call.1} parent=0 // pred_check
    _
  $region39: #{tpu_custom_call.1} parent=0 // pred_check_branch
    %431 = sbr.rel (0) target = $region41
  $region40: #{tpu_custom_call.1} parent=0 // pred_region
    _
  $region41: #{tpu_custom_call.1} parent=0 // pred_fallthru
    _

</llo_original>
